<compile_context>
chip_gen: v7x
topology: tpu7x:2x2x1
jax: 0.10.0
libtpu: 0.0.40
codegen_flags: <defaults>
</compile_context>

<pallas_src>
import functools

import jax
import jax.numpy as jnp
from jax.experimental import pallas as pl
from jax.experimental.pallas import tpu as pltpu


def sid_embeddings_kernel(idx_ref,    # (Bt, C) int32   absolute categorical ids
                          table_ref,  # (V, E)          embedding table
                          num_ref,    # (Bt, N)         numerical values
                          dir_ref,    # (N, N*E)        block-diag(direction)
                          anc_ref,    # (1, N*E)        anchor, flattened
                          text_ref,   # (Bt, T*M)       text inputs, flattened
                          w_ref,      # (T*M, T*E)      block-diag(text weights)
                          out_ref,    # (Bt, F*E)       lane-dense output slab
                          *, C, V, E):
    Bt = idx_ref.shape[0]

    # --- categorical: one-hot gather on the MXU ------------------------------
    # iota hoisted out of the loop (JAX does not CSE broadcast_in_dim).
    iota_v = jax.lax.broadcasted_iota(jnp.int32, (Bt, V), 1)
    for c in range(C):                       # C is small and static
        onehot = (idx_ref[:, c:c + 1] == iota_v).astype(table_ref.dtype)
        out_ref[:, c * E:(c + 1) * E] = jnp.dot(
            onehot, table_ref[...], preferred_element_type=jnp.float32)

    # --- numerical: x @ blockdiag(direction) + anchor -------------------------
    ne = dir_ref.shape[1]                    # N * E
    num_off = C * E
    out_ref[:, num_off:num_off + ne] = (
        jnp.dot(num_ref[...], dir_ref[...], preferred_element_type=jnp.float32)
        + anc_ref[...])

    # --- text: einsum('btm,tmn->btn') as one (Bt,T*M)@(T*M,T*E) matmul --------
    txt_off = num_off + ne
    out_ref[:, txt_off:] = jnp.dot(
        text_ref[...], w_ref[...], preferred_element_type=jnp.float32)


def sid_embeddings(categorical_inputs, numerical_inputs, text_inputs,
                   table, direction, anchor, stacked_weight, offsets,
                   *, max_block_b=128):
    B, C = categorical_inputs.shape
    N = numerical_inputs.shape[1]
    T, M, E = stacked_weight.shape
    V = table.shape[0]
    F = C + N + T

    # Batch tile: full batch if it fits, otherwise a multiple-of-8 tile.
    Bt = B if B <= max_block_b else max_block_b

    # ---- cheap JAX-side glue (all reshapes are free / layout-only) ----------
    idx = (categorical_inputs + offsets).astype(jnp.int32)              # (B, C)
    num = numerical_inputs.astype(jnp.float32)                          # (B, N)
    text2d = text_inputs.astype(jnp.float32).reshape(B, T * M)          # (B, T*M)

    f32 = jnp.float32
    # block-diag(direction): row n holds direction[n] in columns [n*E, (n+1)*E)
    dir_bd = (jnp.eye(N, dtype=f32)[:, :, None]
              * direction.astype(f32)[None, :, :]).reshape(N, N * E)
    anc_flat = anchor.astype(f32).reshape(1, N * E)
    # block-diag(text weights): rows [t*M,(t+1)*M) x cols [t*E,(t+1)*E) = W_t
    w_bd = (jnp.eye(T, dtype=f32)[:, None, :, None]
            * stacked_weight.astype(f32)[:, :, None, :]).reshape(T * M, T * E)

    kernel = functools.partial(sid_embeddings_kernel, C=C, V=V, E=E)

    out_flat = pl.pallas_call(
        kernel,
        out_shape=jax.ShapeDtypeStruct((B, F * E), jnp.float32),
        grid=(pl.cdiv(B, Bt),),
        in_specs=[
            pl.BlockSpec((Bt, C), lambda i: (i, 0)),         # categorical ids
            pl.BlockSpec((V, E), lambda i: (0, 0)),          # table (resident)
            pl.BlockSpec((Bt, N), lambda i: (i, 0)),         # numerical
            pl.BlockSpec((N, N * E), lambda i: (0, 0)),      # direction (bd)
            pl.BlockSpec((1, N * E), lambda i: (0, 0)),      # anchor (flat)
            pl.BlockSpec((Bt, T * M), lambda i: (i, 0)),     # text
            pl.BlockSpec((T * M, T * E), lambda i: (0, 0)),  # text weights (bd)
        ],
        out_specs=pl.BlockSpec((Bt, F * E), lambda i: (i, 0)),
        compiler_params=pltpu.CompilerParams(
            dimension_semantics=("parallel",)),
    )(idx, table, num, dir_bd, anc_flat, text2d, w_bd)

    return out_flat.reshape(B, F, E)


if __name__ == "__main__":
    # Small, deterministic SiDConfig-like setup.
    num_categories_list = [5, 7, 11]          # C = 3 categorical features
    C = len(num_categories_list)
    V = sum(num_categories_list)              # total categories
    N = 4                                     # num_numerical_features
    T = 2                                     # num_text_features
    M = 16                                    # text_input_size
    E = 32                                    # embedding_size
    B = 2                                     # batch

    key = jax.random.PRNGKey(0)
    k = jax.random.split(key, 8)

    # Parameters (deterministic synthetic init; shapes match the nn.Module).
    table = jax.random.normal(k[0], (V, E), jnp.float32) * 0.02
    direction = jax.random.uniform(k[1], (N, E), jnp.float32)
    anchor = jax.random.uniform(k[2], (N, E), jnp.float32)
    # stacked_weight[t] == text_projections[t].weight.T, shape (M, E)
    stacked_weight = jax.random.normal(k[3], (T, M, E), jnp.float32) * 0.1
    offsets = jnp.cumsum(
        jnp.array([[0] + num_categories_list[:-1]], dtype=jnp.int32), axis=1)  # (1, C)

    # Inputs.
    categorical_inputs = jnp.stack(
        [jax.random.randint(k[4 + i], (B,), 0, num_categories_list[i])
         for i in range(C)], axis=1).astype(jnp.int32)                          # (B, C)
    numerical_inputs = jax.random.normal(k[5], (B, N), jnp.float32)             # (B, N)
    text_inputs = jax.random.normal(k[6], (B, T, M), jnp.float32)               # (B, T, M)

    out = sid_embeddings(categorical_inputs, numerical_inputs, text_inputs,
                         table, direction, anchor, stacked_weight, offsets)
    out = jax.block_until_ready(out)

    # Pure-JAX reference for correctness.
    idx = categorical_inputs + offsets
    cat_ref = table[idx]                                                        # (B, C, E)
    num_ref = numerical_inputs[:, :, None] * direction + anchor                 # (B, N, E)
    txt_ref = jnp.einsum('btm,tmn->btn', text_inputs, stacked_weight)           # (B, T, E)
    ref = jnp.concatenate([cat_ref, num_ref, txt_ref], axis=1)                  # (B, F, E)

    assert out.shape == (B, C + N + T, E), out.shape
    assert jnp.allclose(out, ref, atol=1e-4, rtol=1e-4), \
        float(jnp.max(jnp.abs(out - ref)))
    print("KERNEL_OK")
</pallas_src>

<mosaic_0001>
module attributes {stable_mosaic.version = 11 : i64} {
  func.func @sid_embeddings_kernel(%arg0: i32, %arg1: memref<2x3xi32, #tpu.memory_space<vmem>>, %arg2: memref<23x32xf32, #tpu.memory_space<vmem>>, %arg3: memref<2x4xf32, #tpu.memory_space<vmem>>, %arg4: memref<4x128xf32, #tpu.memory_space<vmem>>, %arg5: memref<1x128xf32, #tpu.memory_space<vmem>>, %arg6: memref<2x32xf32, #tpu.memory_space<vmem>>, %arg7: memref<32x64xf32, #tpu.memory_space<vmem>>, %arg8: memref<2x288xf32, #tpu.memory_space<vmem>>) attributes {dimension_semantics = [#tpu.dimension_semantics<parallel>], iteration_bounds = array<i64: 1>, scalar_prefetch = 0 : i64, scratch_operands = 0 : i64, tpu.core_type = #tpu.core_type<tc>, window_params = [{transform_indices = @transform_0, window_bounds = array<i64: 2, 3>}, {pipeline_mode = #tpu.pipeline_mode<synchronous>, transform_indices = @transform_1, window_bounds = array<i64: 23, 32>}, {transform_indices = @transform_2, window_bounds = array<i64: 2, 4>}, {pipeline_mode = #tpu.pipeline_mode<synchronous>, transform_indices = @transform_3, window_bounds = array<i64: 4, 128>}, {pipeline_mode = #tpu.pipeline_mode<synchronous>, transform_indices = @transform_4, window_bounds = array<i64: 1, 128>}, {transform_indices = @transform_5, window_bounds = array<i64: 2, 32>}, {pipeline_mode = #tpu.pipeline_mode<synchronous>, transform_indices = @transform_6, window_bounds = array<i64: 32, 64>}, {transform_indices = @transform_7, window_bounds = array<i64: 2, 288>}]} {
    %0 = tpu.iota {dimensions = array<i32: 1>} : vector<2x23xi32>
    %c0 = arith.constant 0 : index
    %c0_0 = arith.constant 0 : index
    %1 = vector.load %arg1[%c0, %c0_0] : memref<2x3xi32, #tpu.memory_space<vmem>>, vector<2x1xi32>
    %2 = vector.broadcast %1 : vector<2x1xi32> to vector<2x23xi32>
    %3 = arith.cmpi eq, %2, %0 : vector<2x23xi32>
    %4 = arith.extui %3 : vector<2x23xi1> to vector<2x23xi32>
    %5 = arith.sitofp %4 : vector<2x23xi32> to vector<2x23xf32>
    %c0_1 = arith.constant 0 : index
    %c0_2 = arith.constant 0 : index
    %6 = vector.load %arg2[%c0_1, %c0_2] : memref<23x32xf32, #tpu.memory_space<vmem>>, vector<23x32xf32>
    %cst = arith.constant dense<0.000000e+00> : vector<2x32xf32>
    %7 = tpu.matmul %5, %6, %cst {dimension_numbers = #tpu.dot_dimension_numbers<[1], [0], [0], [1], [0, 0, 1, 1], [], []>} : vector<2x23xf32>, vector<23x32xf32>, vector<2x32xf32> -> vector<2x32xf32>
    %c0_3 = arith.constant 0 : index
    %c0_4 = arith.constant 0 : index
    %8 = vector.load %arg8[%c0_3, %c0_4] : memref<2x288xf32, #tpu.memory_space<vmem>>, vector<2x32xf32>
    tpu.vector_store %arg8[%c0_3, %c0_4], %7 {strides = array<i32>} : memref<2x288xf32, #tpu.memory_space<vmem>>, vector<2x32xf32>,
    %c0_5 = arith.constant 0 : index
    %c1 = arith.constant 1 : index
    %9 = vector.load %arg1[%c0_5, %c1] : memref<2x3xi32, #tpu.memory_space<vmem>>, vector<2x1xi32>
    %10 = vector.broadcast %9 : vector<2x1xi32> to vector<2x23xi32>
    %11 = arith.cmpi eq, %10, %0 : vector<2x23xi32>
    %12 = arith.extui %11 : vector<2x23xi1> to vector<2x23xi32>
    %13 = arith.sitofp %12 : vector<2x23xi32> to vector<2x23xf32>
    %c0_6 = arith.constant 0 : index
    %c0_7 = arith.constant 0 : index
    %14 = vector.load %arg2[%c0_6, %c0_7] : memref<23x32xf32, #tpu.memory_space<vmem>>, vector<23x32xf32>
    %cst_8 = arith.constant dense<0.000000e+00> : vector<2x32xf32>
    %15 = tpu.matmul %13, %14, %cst_8 {dimension_numbers = #tpu.dot_dimension_numbers<[1], [0], [0], [1], [0, 0, 1, 1], [], []>} : vector<2x23xf32>, vector<23x32xf32>, vector<2x32xf32> -> vector<2x32xf32>
    %c0_9 = arith.constant 0 : index
    %c32 = arith.constant 32 : index
    %16 = vector.load %arg8[%c0_9, %c32] : memref<2x288xf32, #tpu.memory_space<vmem>>, vector<2x32xf32>
    tpu.vector_store %arg8[%c0_9, %c32], %15 {strides = array<i32>} : memref<2x288xf32, #tpu.memory_space<vmem>>, vector<2x32xf32>,
    %c0_10 = arith.constant 0 : index
    %c2 = arith.constant 2 : index
    %17 = vector.load %arg1[%c0_10, %c2] : memref<2x3xi32, #tpu.memory_space<vmem>>, vector<2x1xi32>
    %18 = vector.broadcast %17 : vector<2x1xi32> to vector<2x23xi32>
    %19 = arith.cmpi eq, %18, %0 : vector<2x23xi32>
    %20 = arith.extui %19 : vector<2x23xi1> to vector<2x23xi32>
    %21 = arith.sitofp %20 : vector<2x23xi32> to vector<2x23xf32>
    %c0_11 = arith.constant 0 : index
    %c0_12 = arith.constant 0 : index
    %22 = vector.load %arg2[%c0_11, %c0_12] : memref<23x32xf32, #tpu.memory_space<vmem>>, vector<23x32xf32>
    %cst_13 = arith.constant dense<0.000000e+00> : vector<2x32xf32>
    %23 = tpu.matmul %21, %22, %cst_13 {dimension_numbers = #tpu.dot_dimension_numbers<[1], [0], [0], [1], [0, 0, 1, 1], [], []>} : vector<2x23xf32>, vector<23x32xf32>, vector<2x32xf32> -> vector<2x32xf32>
    %c0_14 = arith.constant 0 : index
    %c64 = arith.constant 64 : index
    %24 = vector.load %arg8[%c0_14, %c64] : memref<2x288xf32, #tpu.memory_space<vmem>>, vector<2x32xf32>
    tpu.vector_store %arg8[%c0_14, %c64], %23 {strides = array<i32>} : memref<2x288xf32, #tpu.memory_space<vmem>>, vector<2x32xf32>,
    %c0_15 = arith.constant 0 : index
    %c0_16 = arith.constant 0 : index
    %25 = vector.load %arg3[%c0_15, %c0_16] : memref<2x4xf32, #tpu.memory_space<vmem>>, vector<2x4xf32>
    %c0_17 = arith.constant 0 : index
    %c0_18 = arith.constant 0 : index
    %26 = vector.load %arg4[%c0_17, %c0_18] : memref<4x128xf32, #tpu.memory_space<vmem>>, vector<4x128xf32>
    %cst_19 = arith.constant dense<0.000000e+00> : vector<2x128xf32>
    %27 = tpu.matmul %25, %26, %cst_19 {dimension_numbers = #tpu.dot_dimension_numbers<[1], [0], [0], [1], [0, 0, 1, 1], [], []>} : vector<2x4xf32>, vector<4x128xf32>, vector<2x128xf32> -> vector<2x128xf32>
    %c0_20 = arith.constant 0 : index
    %c0_21 = arith.constant 0 : index
    %28 = vector.load %arg5[%c0_20, %c0_21] : memref<1x128xf32, #tpu.memory_space<vmem>>, vector<1x128xf32>
    %29 = vector.broadcast %28 : vector<1x128xf32> to vector<2x128xf32>
    %30 = arith.addf %27, %29 : vector<2x128xf32>
    %c0_22 = arith.constant 0 : index
    %c96 = arith.constant 96 : index
    %31 = vector.load %arg8[%c0_22, %c96] : memref<2x288xf32, #tpu.memory_space<vmem>>, vector<2x128xf32>
    tpu.vector_store %arg8[%c0_22, %c96], %30 {strides = array<i32>} : memref<2x288xf32, #tpu.memory_space<vmem>>, vector<2x128xf32>,
    %c0_23 = arith.constant 0 : index
    %c0_24 = arith.constant 0 : index
    %32 = vector.load %arg6[%c0_23, %c0_24] : memref<2x32xf32, #tpu.memory_space<vmem>>, vector<2x32xf32>
    %c0_25 = arith.constant 0 : index
    %c0_26 = arith.constant 0 : index
    %33 = vector.load %arg7[%c0_25, %c0_26] : memref<32x64xf32, #tpu.memory_space<vmem>>, vector<32x64xf32>
    %cst_27 = arith.constant dense<0.000000e+00> : vector<2x64xf32>
    %34 = tpu.matmul %32, %33, %cst_27 {dimension_numbers = #tpu.dot_dimension_numbers<[1], [0], [0], [1], [0, 0, 1, 1], [], []>} : vector<2x32xf32>, vector<32x64xf32>, vector<2x64xf32> -> vector<2x64xf32>
    %c0_28 = arith.constant 0 : index
    %c224 = arith.constant 224 : index
    %35 = vector.load %arg8[%c0_28, %c224] : memref<2x288xf32, #tpu.memory_space<vmem>>, vector<2x64xf32>
    tpu.vector_store %arg8[%c0_28, %c224], %34 {strides = array<i32>} : memref<2x288xf32, #tpu.memory_space<vmem>>, vector<2x64xf32>,
    return
  }
  func.func @transform_0(%arg0: i32) -> (i32, i32) {
    %c0_i32 = arith.constant 0 : i32
    %c0_i32_0 = arith.constant 0 : i32
    return %arg0, %c0_i32 : i32, i32
  }
  func.func @transform_1(%arg0: i32) -> (i32, i32) {
    %c0_i32 = arith.constant 0 : i32
    %c0_i32_0 = arith.constant 0 : i32
    %c0_i32_1 = arith.constant 0 : i32
    return %c0_i32, %c0_i32_0 : i32, i32
  }
  func.func @transform_2(%arg0: i32) -> (i32, i32) {
    %c0_i32 = arith.constant 0 : i32
    %c0_i32_0 = arith.constant 0 : i32
    return %arg0, %c0_i32 : i32, i32
  }
  func.func @transform_3(%arg0: i32) -> (i32, i32) {
    %c0_i32 = arith.constant 0 : i32
    %c0_i32_0 = arith.constant 0 : i32
    %c0_i32_1 = arith.constant 0 : i32
    return %c0_i32, %c0_i32_0 : i32, i32
  }
  func.func @transform_4(%arg0: i32) -> (i32, i32) {
    %c0_i32 = arith.constant 0 : i32
    %c0_i32_0 = arith.constant 0 : i32
    %c0_i32_1 = arith.constant 0 : i32
    return %c0_i32, %c0_i32_0 : i32, i32
  }
  func.func @transform_5(%arg0: i32) -> (i32, i32) {
    %c0_i32 = arith.constant 0 : i32
    %c0_i32_0 = arith.constant 0 : i32
    return %arg0, %c0_i32 : i32, i32
  }
  func.func @transform_6(%arg0: i32) -> (i32, i32) {
    %c0_i32 = arith.constant 0 : i32
    %c0_i32_0 = arith.constant 0 : i32
    %c0_i32_1 = arith.constant 0 : i32
    return %c0_i32, %c0_i32_0 : i32, i32
  }
  func.func @transform_7(%arg0: i32) -> (i32, i32) {
    %c0_i32 = arith.constant 0 : i32
    %c0_i32_0 = arith.constant 0 : i32
    return %arg0, %c0_i32 : i32, i32
  }
}

</mosaic_0001>

<llo_original>
// kernel: tpu_custom_call.1
$region0: #{tpu_custom_call.1}
  #allocation0 [shape = 'u32[]', space=smem, size = 0x4, offset = 0x4, fixed_abs, tag = 'smem constant byte address 0x4 - core index']
  #allocation1 [shape = 'u32[144,128]{1,0:T(1,128)}', space=vmem, size = 0x12000, scoped, tag = 'internal scratch']
  %s0 = inlined_call_operand.hbm [shape: s32[2,3], index: 0, kind: input, shape index: {}]
  %s1 = inlined_call_operand.hbm [shape: f32[23,32], index: 1, kind: input, shape index: {}]
  %s2 = inlined_call_operand.vmem [shape: f32[2,4], index: 2, kind: input, shape index: {}]
  %s3 = inlined_call_operand.vmem [shape: f32[4,128], index: 3, kind: input, shape index: {}]
  %s4 = inlined_call_operand.vmem [shape: f32[1,128], index: 4, kind: input, shape index: {}]
  %s5 = inlined_call_operand.vmem [shape: f32[2,32], index: 5, kind: input, shape index: {}]
  %s6 = inlined_call_operand.hbm [shape: f32[32,64], index: 6, kind: input, shape index: {}]
  %s7 = inlined_call_operand.hbm [shape: f32[2,288], index: 7, kind: output, shape index: {}]
  %s8 = sld [smem:[#allocation0]]
  $region50: #{tpu_custom_call.1} parent=0
    _
  %s10 = ssub.s32 1, %s8
  %s11 = scalar_select 0, %s10, %s8
  $region1: #{tpu_custom_call.1} parent=0
    #allocation2 [shape = 'u8[1024]{0}', space=vmem, size = 0x400, scoped, tag = 'input window, operand 0, single buffered']
    #allocation3 [shape = 's32[1]{0}', space=sflag, size = 0x4, scoped, tag = 'scoped memory for tpu_custom_call.1']
    #allocation4 [shape = 's32[1]{0}', space=sflag, size = 0x4, scoped, tag = 'scoped memory for tpu_custom_call.1']
    #allocation5 [shape = 'u8[12288]{0}', space=vmem, size = 0x3000, scoped, tag = 'input window, operand 1, single buffered']
    #allocation6 [shape = 's32[1]{0}', space=sflag, size = 0x4, scoped, tag = 'scoped memory for tpu_custom_call.1']
    #allocation7 [shape = 'u8[16384]{0}', space=vmem, size = 0x4000, scoped, tag = 'input window, operand 6, single buffered']
    #allocation8 [shape = 'u8[3072]{0}', space=vmem, size = 0xc00, scoped, tag = 'output window, operand 0, single buffered']
    %12 = vsyncpa [#allocation3], 0
    %13 = vsyncpa [#allocation6], 0
    %14 = vsyncpa [#allocation4], 0
    // Predicated region
    $region2: #{tpu_custom_call.1} parent=1 // pred_check
      _
    $region3: #{tpu_custom_call.1} parent=1 // pred_check_branch
      %16 = sbr.rel (0) target = $region5
    $region4: #{tpu_custom_call.1} parent=1 // pred_region
      %s18 = ssub.s32 32, 32
      %19 = vsyncadd [#allocation3], %s18
      %s21 = sshll.u32 [#allocation2], 4
      %s22 = int_to_ptr.vmem [resolvable:$true] %s21
      %24 = dma.hbm_to_vmem [thread:$0]  %s0, 32, %s22, [#allocation3]
    $region5: #{tpu_custom_call.1} parent=1 // pred_fallthru
      _
    // Predicated region
    $region6: #{tpu_custom_call.1} parent=1 // pred_check
      _
    $region7: #{tpu_custom_call.1} parent=1 // pred_check_branch
      %26 = sbr.rel (0) target = $region9
    $region8: #{tpu_custom_call.1} parent=1 // pred_region
      %s28 = ssub.s32 384, 384
      %29 = vsyncadd [#allocation6], %s28
      %s30 = sshll.u32 [#allocation5], 4
      %s31 = int_to_ptr.vmem [resolvable:$true] %s30
      %36 = dma.hbm_to_vmem [thread:$0]  %s1, 384, %s31, [#allocation6], 128, 128, 8
    $region9: #{tpu_custom_call.1} parent=1 // pred_fallthru
      _
    // Predicated region
    $region10: #{tpu_custom_call.1} parent=1 // pred_check
      _
    $region11: #{tpu_custom_call.1} parent=1 // pred_check_branch
      %38 = sbr.rel (0) target = $region13
    $region12: #{tpu_custom_call.1} parent=1 // pred_region
      _
    $region13: #{tpu_custom_call.1} parent=1 // pred_fallthru
      _
    // Predicated region
    $region14: #{tpu_custom_call.1} parent=1 // pred_check
      _
    $region15: #{tpu_custom_call.1} parent=1 // pred_check_branch
      %40 = sbr.rel (0) target = $region17
    $region16: #{tpu_custom_call.1} parent=1 // pred_region
      _
    $region17: #{tpu_custom_call.1} parent=1 // pred_fallthru
      _
    // Predicated region
    $region18: #{tpu_custom_call.1} parent=1 // pred_check
      _
    $region19: #{tpu_custom_call.1} parent=1 // pred_check_branch
      %42 = sbr.rel (0) target = $region21
    $region20: #{tpu_custom_call.1} parent=1 // pred_region
      _
    $region21: #{tpu_custom_call.1} parent=1 // pred_fallthru
      _
    // Predicated region
    $region22: #{tpu_custom_call.1} parent=1 // pred_check
      _
    $region23: #{tpu_custom_call.1} parent=1 // pred_check_branch
      %44 = sbr.rel (0) target = $region25
    $region24: #{tpu_custom_call.1} parent=1 // pred_region
      _
    $region25: #{tpu_custom_call.1} parent=1 // pred_fallthru
      _
    // Predicated region
    $region26: #{tpu_custom_call.1} parent=1 // pred_check
      _
    $region27: #{tpu_custom_call.1} parent=1 // pred_check_branch
      %46 = sbr.rel (0) target = $region29
    $region28: #{tpu_custom_call.1} parent=1 // pred_region
      %s48 = ssub.s32 512, 512
      %49 = vsyncadd [#allocation6], %s48
      %s50 = sshll.u32 [#allocation7], 4
      %s51 = int_to_ptr.vmem [resolvable:$true] %s50
      %56 = dma.hbm_to_vmem [thread:$0]  %s6, 512, %s51, [#allocation6], 128, 128, 8
    $region29: #{tpu_custom_call.1} parent=1 // pred_fallthru
      _
    // Predicated region
    $region30: #{tpu_custom_call.1} parent=1 // pred_check
      _
    $region31: #{tpu_custom_call.1} parent=1 // pred_check_branch
      %58 = sbr.rel (0) target = $region33
    $region32: #{tpu_custom_call.1} parent=1 // pred_region
      %59 = dma.done [#allocation3], 32
    $region33: #{tpu_custom_call.1} parent=1 // pred_fallthru
      _
    // Predicated region
    $region34: #{tpu_custom_call.1} parent=1 // pred_check
      _
    $region35: #{tpu_custom_call.1} parent=1 // pred_check_branch
      %61 = sbr.rel (0) target = $region37
    $region36: #{tpu_custom_call.1} parent=1 // pred_region
      %62 = dma.done [#allocation6], 384
    $region37: #{tpu_custom_call.1} parent=1 // pred_fallthru
      _
    // Predicated region
    $region38: #{tpu_custom_call.1} parent=1 // pred_check
      _
    $region39: #{tpu_custom_call.1} parent=1 // pred_check_branch
      %64 = sbr.rel (0) target = $region41
    $region40: #{tpu_custom_call.1} parent=1 // pred_region
      %65 = dma.done [#allocation6], 512
    $region41: #{tpu_custom_call.1} parent=1 // pred_fallthru
      _
    %v66 = vlaneseq
    %v67 = vand.u32 %v66, 127
    %v68 = vld [vmem:[#allocation2] sm:$0x3]
    %69 = vset.pattern.permute.xlu0 0
    %70 = vperm.xlu0 %69, %v68
    %v71 = vpop.permute.xlu0 %70
    %vm72 = vcmp.eq.s32.totalorder %v71, %v67
    %v73 = vsel %vm72, 1, 0
    %v74 = vcvt.s32.f32 %v73
    %v75 = vld [vmem:[#allocation5] sm:$0xff]
    %v76 = vld [vmem:[#allocation5 + $0x8] sm:$0xff]
    %v77 = vld [vmem:[#allocation5 + $0x10] sm:$0x7f]
    %vm78 = vcmask 187392
    %v80 = vsel %vm78, %v74, 0
    %vm82 = vcmask 1046528
    %v84 = vsel %vm82, %v77, 0
    %86 = vmatprep.subr.mxu0 0.0
    %87 = vmatpush1.msra.mxu0 %v75
    %88 = vmatprep.subr.mxu0 0.0
    %89 = vmatpush1.msra.mxu0 %v76
    %90 = vmatprep.subr.mxu0 0.0
    %91 = vmatpush1.msra.mxu0 %v84
    %92 = vmatprep.subr.mxu0 0.0
    %93 = vmatpush1.msra.mxu0 0.0
    %94 = vmatprep.subr.mxu0 0.0
    %95 = vmatpush1.msra.mxu0 0.0
    %96 = vmatprep.subr.mxu0 0.0
    %97 = vmatpush1.msra.mxu0 0.0
    %98 = vmatprep.subr.mxu0 0.0
    %99 = vmatpush1.msra.mxu0 0.0
    %100 = vmatprep.subr.mxu0 0.0
    %101 = vmatpush1.msra.mxu0 0.0
    %102 = vmatprep.subr.mxu0 0.0
    %103 = vmatpush1.msra.mxu0 0.0
    %104 = vmatprep.subr.mxu0 0.0
    %105 = vmatpush1.msra.mxu0 0.0
    %106 = vmatprep.subr.mxu0 0.0
    %107 = vmatpush1.msra.mxu0 0.0
    %108 = vmatprep.subr.mxu0 0.0
    %109 = vmatpush1.msra.mxu0 0.0
    %110 = vmatprep.subr.mxu0 0.0
    %111 = vmatpush1.msra.mxu0 0.0
    %112 = vmatprep.subr.mxu0 0.0
    %113 = vmatpush1.msra.mxu0 0.0
    %114 = vmatprep.subr.mxu0 0.0
    %115 = vmatpush1.msra.mxu0 0.0
    %116 = vmatprep.subr.mxu0 0.0
    %117 = vmatpush1.msra.mxu0 0.0
    %118 = vmatprep.subr.mxu0 0.0
    %119 = vmatpush1.msra.mxu0 0.0
    %120 = vmatprep.subr.mxu0 0.0
    %121 = vmatpush1.msra.mxu0 0.0
    %122 = vmatprep.subr.mxu0 0.0
    %123 = vmatpush1.msra.mxu0 0.0
    %124 = vmatprep.subr.mxu0 0.0
    %125 = vmatpush1.msra.mxu0 0.0
    %126 = vmatprep.subr.mxu0 0.0
    %127 = vmatpush1.msra.mxu0 0.0
    %128 = vmatprep.subr.mxu0 0.0
    %129 = vmatpush1.msra.mxu0 0.0
    %130 = vmatprep.subr.mxu0 0.0
    %131 = vmatpush1.msra.mxu0 0.0
    %132 = vmatprep.subr.mxu0 0.0
    %133 = vmatpush1.msra.mxu0 0.0
    %134 = vmatprep.subr.mxu0 0.0
    %135 = vmatpush1.msra.mxu0 0.0
    %136 = vmatprep.subr.mxu0 0.0
    %137 = vmatpush1.msra.mxu0 0.0
    %138 = vmatprep.subr.mxu0 0.0
    %139 = vmatpush1.msra.mxu0 0.0
    %140 = vmatprep.subr.mxu0 0.0
    %141 = vmatpush1.msra.mxu0 0.0
    %142 = vmatprep.subr.mxu0 0.0
    %143 = vmatpush1.msra.mxu0 0.0
    %144 = vmatprep.subr.mxu0 0.0
    %145 = vmatpush1.msra.mxu0 0.0
    %146 = vmatprep.subr.mxu0 0.0
    %147 = vmatpush1.msra.mxu0 0.0
    %148 = vmatprep.subr.mxu0 0.0
    %149 = vmatpush1.msra.mxu0 0.0
    %150 = vmatprep.mubr.f32.mxu0 0.0
    %151 = vmatmul.mubr.f32.gmra.mrb[0].mxu0 %v80
    %v152 = vpop.f32.mrb[0].mxu0
    %v153 = vadd.f32 0.0, %v152
    %v154 = vpop.f32.mrb[0].mxu0
    %155 = vdwg.mxu0
    %vm156 = vcmask 254976
    %157 = vst.msk [vmem:[#allocation8] sm:$0x3] %vm156, %v153
    %v158 = vld [vmem:[#allocation2] sm:$0x3]
    %159 = vset.pattern.permute.xlu0 1
    %160 = vperm.xlu0 %159, %v158
    %v161 = vpop.permute.xlu0 %160
    %vm162 = vcmp.eq.s32.totalorder %v161, %v67
    %v163 = vsel %vm162, 1, 0
    %v164 = vcvt.s32.f32 %v163
    %v165 = vld [vmem:[#allocation5] sm:$0xff]
    %v166 = vld [vmem:[#allocation5 + $0x8] sm:$0xff]
    %v167 = vld [vmem:[#allocation5 + $0x10] sm:$0x7f]
    %v169 = vsel %vm78, %v164, 0
    %v172 = vsel %vm82, %v167, 0
    %174 = vmatprep.subr.mxu0 0.0
    %175 = vmatpush1.msra.mxu0 %v165
    %176 = vmatprep.subr.mxu0 0.0
    %177 = vmatpush1.msra.mxu0 %v166
    %178 = vmatprep.subr.mxu0 0.0
    %179 = vmatpush1.msra.mxu0 %v172
    %180 = vmatprep.subr.mxu0 0.0
    %181 = vmatpush1.msra.mxu0 0.0
    %182 = vmatprep.subr.mxu0 0.0
    %183 = vmatpush1.msra.mxu0 0.0
    %184 = vmatprep.subr.mxu0 0.0
    %185 = vmatpush1.msra.mxu0 0.0
    %186 = vmatprep.subr.mxu0 0.0
    %187 = vmatpush1.msra.mxu0 0.0
    %188 = vmatprep.subr.mxu0 0.0
    %189 = vmatpush1.msra.mxu0 0.0
    %190 = vmatprep.subr.mxu0 0.0
    %191 = vmatpush1.msra.mxu0 0.0
    %192 = vmatprep.subr.mxu0 0.0
    %193 = vmatpush1.msra.mxu0 0.0
    %194 = vmatprep.subr.mxu0 0.0
    %195 = vmatpush1.msra.mxu0 0.0
    %196 = vmatprep.subr.mxu0 0.0
    %197 = vmatpush1.msra.mxu0 0.0
    %198 = vmatprep.subr.mxu0 0.0
    %199 = vmatpush1.msra.mxu0 0.0
    %200 = vmatprep.subr.mxu0 0.0
    %201 = vmatpush1.msra.mxu0 0.0
    %202 = vmatprep.subr.mxu0 0.0
    %203 = vmatpush1.msra.mxu0 0.0
    %204 = vmatprep.subr.mxu0 0.0
    %205 = vmatpush1.msra.mxu0 0.0
    %206 = vmatprep.subr.mxu0 0.0
    %207 = vmatpush1.msra.mxu0 0.0
    %208 = vmatprep.subr.mxu0 0.0
    %209 = vmatpush1.msra.mxu0 0.0
    %210 = vmatprep.subr.mxu0 0.0
    %211 = vmatpush1.msra.mxu0 0.0
    %212 = vmatprep.subr.mxu0 0.0
    %213 = vmatpush1.msra.mxu0 0.0
    %214 = vmatprep.subr.mxu0 0.0
    %215 = vmatpush1.msra.mxu0 0.0
    %216 = vmatprep.subr.mxu0 0.0
    %217 = vmatpush1.msra.mxu0 0.0
    %218 = vmatprep.subr.mxu0 0.0
    %219 = vmatpush1.msra.mxu0 0.0
    %220 = vmatprep.subr.mxu0 0.0
    %221 = vmatpush1.msra.mxu0 0.0
    %222 = vmatprep.subr.mxu0 0.0
    %223 = vmatpush1.msra.mxu0 0.0
    %224 = vmatprep.subr.mxu0 0.0
    %225 = vmatpush1.msra.mxu0 0.0
    %226 = vmatprep.subr.mxu0 0.0
    %227 = vmatpush1.msra.mxu0 0.0
    %228 = vmatprep.subr.mxu0 0.0
    %229 = vmatpush1.msra.mxu0 0.0
    %230 = vmatprep.subr.mxu0 0.0
    %231 = vmatpush1.msra.mxu0 0.0
    %232 = vmatprep.subr.mxu0 0.0
    %233 = vmatpush1.msra.mxu0 0.0
    %234 = vmatprep.subr.mxu0 0.0
    %235 = vmatpush1.msra.mxu0 0.0
    %236 = vmatprep.subr.mxu0 0.0
    %237 = vmatpush1.msra.mxu0 0.0
    %238 = vmatprep.mubr.f32.mxu0 0.0
    %239 = vmatmul.mubr.f32.gmra.mrb[0].mxu0 %v169
    %v240 = vpop.f32.mrb[0].mxu0
    %v241 = vadd.f32 0.0, %v240
    %v242 = vpop.f32.mrb[0].mxu0
    %243 = vdwg.mxu0
    %v246 = vunpack.c.l.s4 1983009808
    %v247 = vunpack.c.0.s8 %v246
    %v248 = vlaneseq
    %v249 = vshrl.u32 %v248, 7
    %v250 = vsub.s32 %v247, %v249
    %v251 = vrot.slane %v241, %v250
    %252 = vrot.lane.b32.xlu0 %v251, 32
    %v253 = vpop.permute.xlu0 %252
    %vm255 = vcmask 517376
    %256 = vst.msk [vmem:[#allocation8] sm:$0x3] %vm255, %v253
    %v257 = vld [vmem:[#allocation2] sm:$0x3]
    %258 = vset.pattern.permute.xlu0 2
    %259 = vperm.xlu0 %258, %v257
    %v260 = vpop.permute.xlu0 %259
    %vm261 = vcmp.eq.s32.totalorder %v260, %v67
    %v262 = vsel %vm261, 1, 0
    %v263 = vcvt.s32.f32 %v262
    %v264 = vld [vmem:[#allocation5] sm:$0xff]
    %v265 = vld [vmem:[#allocation5 + $0x8] sm:$0xff]
    %v266 = vld [vmem:[#allocation5 + $0x10] sm:$0x7f]
    %v268 = vsel %vm78, %v263, 0
    %v271 = vsel %vm82, %v266, 0
    %273 = vmatprep.subr.mxu0 0.0
    %274 = vmatpush1.msra.mxu0 %v264
    %275 = vmatprep.subr.mxu0 0.0
    %276 = vmatpush1.msra.mxu0 %v265
    %277 = vmatprep.subr.mxu0 0.0
    %278 = vmatpush1.msra.mxu0 %v271
    %279 = vmatprep.subr.mxu0 0.0
    %280 = vmatpush1.msra.mxu0 0.0
    %281 = vmatprep.subr.mxu0 0.0
    %282 = vmatpush1.msra.mxu0 0.0
    %283 = vmatprep.subr.mxu0 0.0
    %284 = vmatpush1.msra.mxu0 0.0
    %285 = vmatprep.subr.mxu0 0.0
    %286 = vmatpush1.msra.mxu0 0.0
    %287 = vmatprep.subr.mxu0 0.0
    %288 = vmatpush1.msra.mxu0 0.0
    %289 = vmatprep.subr.mxu0 0.0
    %290 = vmatpush1.msra.mxu0 0.0
    %291 = vmatprep.subr.mxu0 0.0
    %292 = vmatpush1.msra.mxu0 0.0
    %293 = vmatprep.subr.mxu0 0.0
    %294 = vmatpush1.msra.mxu0 0.0
    %295 = vmatprep.subr.mxu0 0.0
    %296 = vmatpush1.msra.mxu0 0.0
    %297 = vmatprep.subr.mxu0 0.0
    %298 = vmatpush1.msra.mxu0 0.0
    %299 = vmatprep.subr.mxu0 0.0
    %300 = vmatpush1.msra.mxu0 0.0
    %301 = vmatprep.subr.mxu0 0.0
    %302 = vmatpush1.msra.mxu0 0.0
    %303 = vmatprep.subr.mxu0 0.0
    %304 = vmatpush1.msra.mxu0 0.0
    %305 = vmatprep.subr.mxu0 0.0
    %306 = vmatpush1.msra.mxu0 0.0
    %307 = vmatprep.subr.mxu0 0.0
    %308 = vmatpush1.msra.mxu0 0.0
    %309 = vmatprep.subr.mxu0 0.0
    %310 = vmatpush1.msra.mxu0 0.0
    %311 = vmatprep.subr.mxu0 0.0
    %312 = vmatpush1.msra.mxu0 0.0
    %313 = vmatprep.subr.mxu0 0.0
    %314 = vmatpush1.msra.mxu0 0.0
    %315 = vmatprep.subr.mxu0 0.0
    %316 = vmatpush1.msra.mxu0 0.0
    %317 = vmatprep.subr.mxu0 0.0
    %318 = vmatpush1.msra.mxu0 0.0
    %319 = vmatprep.subr.mxu0 0.0
    %320 = vmatpush1.msra.mxu0 0.0
    %321 = vmatprep.subr.mxu0 0.0
    %322 = vmatpush1.msra.mxu0 0.0
    %323 = vmatprep.subr.mxu0 0.0
    %324 = vmatpush1.msra.mxu0 0.0
    %325 = vmatprep.subr.mxu0 0.0
    %326 = vmatpush1.msra.mxu0 0.0
    %327 = vmatprep.subr.mxu0 0.0
    %328 = vmatpush1.msra.mxu0 0.0
    %329 = vmatprep.subr.mxu0 0.0
    %330 = vmatpush1.msra.mxu0 0.0
    %331 = vmatprep.subr.mxu0 0.0
    %332 = vmatpush1.msra.mxu0 0.0
    %333 = vmatprep.subr.mxu0 0.0
    %334 = vmatpush1.msra.mxu0 0.0
    %335 = vmatprep.subr.mxu0 0.0
    %336 = vmatpush1.msra.mxu0 0.0
    %337 = vmatprep.mubr.f32.mxu0 0.0
    %338 = vmatmul.mubr.f32.gmra.mrb[0].mxu0 %v268
    %v339 = vpop.f32.mrb[0].mxu0
    %v340 = vadd.f32 0.0, %v339
    %v341 = vpop.f32.mrb[0].mxu0
    %342 = vdwg.mxu0
    %v345 = vunpack.c.l.s4 1983009808
    %v346 = vunpack.c.0.s8 %v345
    %v347 = vlaneseq
    %v348 = vshrl.u32 %v347, 7
    %v349 = vsub.s32 %v346, %v348
    %v350 = vrot.slane %v340, %v349
    %351 = vrot.lane.b32.xlu0 %v350, 64
    %v352 = vpop.permute.xlu0 %351
    %vm354 = vcmask 779776
    %355 = vst.msk [vmem:[#allocation8] sm:$0x3] %vm354, %v352
    %v356 = vld [vmem:[%s2] sm:$0x3]
    %v357 = vld [vmem:[%s3] sm:$0xf]
    %v358 = vld [vmem:[%s4] sm:$0x1]
    %v360 = vlaneseq
    %v361 = vshrl.u32 %v360, 7
    %v362 = vsub.s32 0, %v361
    %v363 = vrot.slane %v358, %v362
    %vm365 = vcmask 31744
    %v367 = vsel %vm365, %v356, 0
    %vm369 = vcmask 1043456
    %v371 = vsel %vm369, %v357, 0
    %373 = vmatprep.subr.mxu0 0.0
    %374 = vmatpush1.msra.mxu0 %v371
    %375 = vmatprep.subr.mxu0 0.0
    %376 = vmatpush1.msra.mxu0 0.0
    %377 = vmatprep.subr.mxu0 0.0
    %378 = vmatpush1.msra.mxu0 0.0
    %379 = vmatprep.subr.mxu0 0.0
    %380 = vmatpush1.msra.mxu0 0.0
    %381 = vmatprep.subr.mxu0 0.0
    %382 = vmatpush1.msra.mxu0 0.0
    %383 = vmatprep.subr.mxu0 0.0
    %384 = vmatpush1.msra.mxu0 0.0
    %385 = vmatprep.subr.mxu0 0.0
    %386 = vmatpush1.msra.mxu0 0.0
    %387 = vmatprep.subr.mxu0 0.0
    %388 = vmatpush1.msra.mxu0 0.0
    %389 = vmatprep.subr.mxu0 0.0
    %390 = vmatpush1.msra.mxu0 0.0
    %391 = vmatprep.subr.mxu0 0.0
    %392 = vmatpush1.msra.mxu0 0.0
    %393 = vmatprep.subr.mxu0 0.0
    %394 = vmatpush1.msra.mxu0 0.0
    %395 = vmatprep.subr.mxu0 0.0
    %396 = vmatpush1.msra.mxu0 0.0
    %397 = vmatprep.subr.mxu0 0.0
    %398 = vmatpush1.msra.mxu0 0.0
    %399 = vmatprep.subr.mxu0 0.0
    %400 = vmatpush1.msra.mxu0 0.0
    %401 = vmatprep.subr.mxu0 0.0
    %402 = vmatpush1.msra.mxu0 0.0
    %403 = vmatprep.subr.mxu0 0.0
    %404 = vmatpush1.msra.mxu0 0.0
    %405 = vmatprep.subr.mxu0 0.0
    %406 = vmatpush1.msra.mxu0 0.0
    %407 = vmatprep.subr.mxu0 0.0
    %408 = vmatpush1.msra.mxu0 0.0
    %409 = vmatprep.subr.mxu0 0.0
    %410 = vmatpush1.msra.mxu0 0.0
    %411 = vmatprep.subr.mxu0 0.0
    %412 = vmatpush1.msra.mxu0 0.0
    %413 = vmatprep.subr.mxu0 0.0
    %414 = vmatpush1.msra.mxu0 0.0
    %415 = vmatprep.subr.mxu0 0.0
    %416 = vmatpush1.msra.mxu0 0.0
    %417 = vmatprep.subr.mxu0 0.0
    %418 = vmatpush1.msra.mxu0 0.0
    %419 = vmatprep.subr.mxu0 0.0
    %420 = vmatpush1.msra.mxu0 0.0
    %421 = vmatprep.subr.mxu0 0.0
    %422 = vmatpush1.msra.mxu0 0.0
    %423 = vmatprep.subr.mxu0 0.0
    %424 = vmatpush1.msra.mxu0 0.0
    %425 = vmatprep.subr.mxu0 0.0
    %426 = vmatpush1.msra.mxu0 0.0
    %427 = vmatprep.subr.mxu0 0.0
    %428 = vmatpush1.msra.mxu0 0.0
    %429 = vmatprep.subr.mxu0 0.0
    %430 = vmatpush1.msra.mxu0 0.0
    %431 = vmatprep.subr.mxu0 0.0
    %432 = vmatpush1.msra.mxu0 0.0
    %433 = vmatprep.subr.mxu0 0.0
    %434 = vmatpush1.msra.mxu0 0.0
    %435 = vmatprep.subr.mxu0 0.0
    %436 = vmatpush1.msra.mxu0 0.0
    %437 = vmatprep.mubr.f32.mxu0 0.0
    %438 = vmatmul.mubr.f32.gmra.mrb[0].mxu0 %v367
    %v439 = vpop.f32.mrb[0].mxu0
    %v440 = vadd.f32 %v363, %v439
    %v441 = vpop.f32.mrb[0].mxu0
    %442 = vdwg.mxu0
    %v445 = vunpack.c.l.s4 1983009808
    %v446 = vunpack.c.0.s8 %v445
    %v447 = vlaneseq
    %v448 = vshrl.u32 %v447, 7
    %v449 = vsub.s32 %v446, %v448
    %v450 = vrot.slane %v440, %v449
    %451 = vrot.lane.b32.xlu0 %v450, 96
    %v452 = vpop.permute.xlu0 %451
    %v453 = vrot.slane %v452, 6
    %vm454 = vcmask 785408
    %v455 = vsel %vm454, %v453, %v452
    %vm457 = vcmask 1042176
    %vm458 = vcmask 781314
    %vm459 = vmor %vm458, %vm457
    %460 = vst.msk [vmem:[#allocation8] sm:$0xf] %vm459, %v455
    %v461 = vld [vmem:[%s5] sm:$0x3]
    %v462 = vld [vmem:[#allocation7] sm:$0xff]
    %v463 = vld [vmem:[#allocation7 + $0x8] sm:$0xff]
    %v464 = vld [vmem:[#allocation7 + $0x10] sm:$0xff]
    %v465 = vld [vmem:[#allocation7 + $0x18] sm:$0xff]
    %vm466 = vcmask 261120
    %v468 = vsel %vm466, %v461, 0
    %470 = vmatprep.subr.mxu0 0.0
    %471 = vmatpush1.msra.mxu0 %v462
    %472 = vmatprep.subr.mxu0 0.0
    %473 = vmatpush1.msra.mxu0 %v463
    %474 = vmatprep.subr.mxu0 0.0
    %475 = vmatpush1.msra.mxu0 %v464
    %476 = vmatprep.subr.mxu0 0.0
    %477 = vmatpush1.msra.mxu0 %v465
    %478 = vmatprep.subr.mxu0 0.0
    %479 = vmatpush1.msra.mxu0 0.0
    %480 = vmatprep.subr.mxu0 0.0
    %481 = vmatpush1.msra.mxu0 0.0
    %482 = vmatprep.subr.mxu0 0.0
    %483 = vmatpush1.msra.mxu0 0.0
    %484 = vmatprep.subr.mxu0 0.0
    %485 = vmatpush1.msra.mxu0 0.0
    %486 = vmatprep.subr.mxu0 0.0
    %487 = vmatpush1.msra.mxu0 0.0
    %488 = vmatprep.subr.mxu0 0.0
    %489 = vmatpush1.msra.mxu0 0.0
    %490 = vmatprep.subr.mxu0 0.0
    %491 = vmatpush1.msra.mxu0 0.0
    %492 = vmatprep.subr.mxu0 0.0
    %493 = vmatpush1.msra.mxu0 0.0
    %494 = vmatprep.subr.mxu0 0.0
    %495 = vmatpush1.msra.mxu0 0.0
    %496 = vmatprep.subr.mxu0 0.0
    %497 = vmatpush1.msra.mxu0 0.0
    %498 = vmatprep.subr.mxu0 0.0
    %499 = vmatpush1.msra.mxu0 0.0
    %500 = vmatprep.subr.mxu0 0.0
    %501 = vmatpush1.msra.mxu0 0.0
    %502 = vmatprep.subr.mxu0 0.0
    %503 = vmatpush1.msra.mxu0 0.0
    %504 = vmatprep.subr.mxu0 0.0
    %505 = vmatpush1.msra.mxu0 0.0
    %506 = vmatprep.subr.mxu0 0.0
    %507 = vmatpush1.msra.mxu0 0.0
    %508 = vmatprep.subr.mxu0 0.0
    %509 = vmatpush1.msra.mxu0 0.0
    %510 = vmatprep.subr.mxu0 0.0
    %511 = vmatpush1.msra.mxu0 0.0
    %512 = vmatprep.subr.mxu0 0.0
    %513 = vmatpush1.msra.mxu0 0.0
    %514 = vmatprep.subr.mxu0 0.0
    %515 = vmatpush1.msra.mxu0 0.0
    %516 = vmatprep.subr.mxu0 0.0
    %517 = vmatpush1.msra.mxu0 0.0
    %518 = vmatprep.subr.mxu0 0.0
    %519 = vmatpush1.msra.mxu0 0.0
    %520 = vmatprep.subr.mxu0 0.0
    %521 = vmatpush1.msra.mxu0 0.0
    %522 = vmatprep.subr.mxu0 0.0
    %523 = vmatpush1.msra.mxu0 0.0
    %524 = vmatprep.subr.mxu0 0.0
    %525 = vmatpush1.msra.mxu0 0.0
    %526 = vmatprep.subr.mxu0 0.0
    %527 = vmatpush1.msra.mxu0 0.0
    %528 = vmatprep.subr.mxu0 0.0
    %529 = vmatpush1.msra.mxu0 0.0
    %530 = vmatprep.subr.mxu0 0.0
    %531 = vmatpush1.msra.mxu0 0.0
    %532 = vmatprep.subr.mxu0 0.0
    %533 = vmatpush1.msra.mxu0 0.0
    %534 = vmatprep.mubr.f32.mxu0 0.0
    %535 = vmatmul.mubr.f32.gmra.mrb[0].mxu0 %v468
    %v536 = vpop.f32.mrb[0].mxu0
    %v537 = vadd.f32 0.0, %v536
    %v538 = vpop.f32.mrb[0].mxu0
    %539 = vdwg.mxu0
    %v542 = vunpack.c.l.s4 1983009808
    %v543 = vunpack.c.0.s8 %v542
    %v544 = vlaneseq
    %v545 = vshrl.u32 %v544, 7
    %v546 = vsub.s32 %v543, %v545
    %v547 = vrot.slane %v537, %v546
    %548 = vrot.lane.b32.xlu0 %v547, 96
    %v549 = vpop.permute.xlu0 %548
    %v550 = vrot.slane %v549, 6
    %v551 = vsel %vm454, %v550, %v549
    %vm553 = vcmask 257026
    %vm554 = vmor %vm553, %vm457
    %555 = vst.msk [vmem:[#allocation8 + $0x2] sm:$0xf] %vm554, %v551
    // Predicated region
    $region42: #{tpu_custom_call.1} parent=1 // pred_check
      _
    $region43: #{tpu_custom_call.1} parent=1 // pred_check_branch
      %557 = sbr.rel (0) target = $region45
    $region44: #{tpu_custom_call.1} parent=1 // pred_region
      %s559 = ssub.s32 96, 96
      %560 = vsyncadd [#allocation4], %s559
      %s562 = sshll.u32 [#allocation8], 4
      %s563 = int_to_ptr.vmem [resolvable:$true] %s562
      %565 = dma.vmem_to_hbm [thread:$0]  %s563, 96, %s7, [#allocation4]
    $region45: #{tpu_custom_call.1} parent=1 // pred_fallthru
      _
    // Predicated region
    $region46: #{tpu_custom_call.1} parent=1 // pred_check
      _
    $region47: #{tpu_custom_call.1} parent=1 // pred_check_branch
      %567 = sbr.rel (0) target = $region49
    $region48: #{tpu_custom_call.1} parent=1 // pred_region
      %568 = dma.done [#allocation4], 96
    $region49: #{tpu_custom_call.1} parent=1 // pred_fallthru
      _
    %569 = vsyncpa [#allocation3], 1
    %570 = vsyncpa [#allocation6], 1
    %571 = vsyncpa [#allocation4], 1

</llo_original>
